<compile_context>
chip_gen: v5e
topology: v5e:2x2
jax: 0.10.0
libtpu: 0.0.40
codegen_flags: <defaults>
</compile_context>

<pallas_src>
from functools import partial

import jax
import jax.numpy as jnp
from jax.experimental import pallas as pl
from jax.experimental.pallas import tpu as pltpu


# ----------------------------------------------------------------------------
# One fused kernel: conv3x3(+bias+ReLU) backbone -> GAP -> both linear heads.
# ----------------------------------------------------------------------------
def _fused_backbone_heads_kernel(x_ref, wc_ref, bc_ref, wh_ref, bh_ref,
                                 fmap_ref, logits_ref, *, batch, hw):
    # x_ref:      (B*H*W, 9*Cin)  bf16  im2col'd padded input patches
    # wc_ref:     (9*Cin, Cout)   bf16  conv weight, taps flattened into K
    # bc_ref:     (1, Cout)       f32   conv bias
    # wh_ref:     (Cout, N1+N2)   f32   both head weights, concatenated along N
    # bh_ref:     (1, N1+N2)      f32   both head biases, concatenated
    # fmap_ref:   (B*H*W, Cout)   f32   backbone feature map (flattened NHWC)
    # logits_ref: (B, N1+N2)      f32   concatenated head logits

    # 3x3 conv as ONE im2col matmul on the MXU (bf16 operands, f32 accumulation),
    # then bias + ReLU in f32 on the VPU.
    acc = jnp.dot(x_ref[...], wc_ref[...], preferred_element_type=jnp.float32)
    fmap = jnp.maximum(acc + bc_ref[...], 0.0)
    fmap_ref[...] = fmap.astype(fmap_ref.dtype)

    # Global average pool as a matmul with an in-kernel block-pooling matrix:
    # pool[b, j] = 1/HW  iff  b*HW <= j < (b+1)*HW.  Keeps the reduction on the
    # MXU and avoids any cross-tile reshape / XLU sublane reduction.
    m = batch * hw
    col = jax.lax.broadcasted_iota(jnp.int32, (batch, m), 1)
    lo = jax.lax.broadcasted_iota(jnp.int32, (batch, m), 0) * hw
    pool = jnp.where((col >= lo) & (col < lo + hw), 1.0 / hw, 0.0).astype(jnp.float32)
    feats = jnp.dot(pool, fmap, preferred_element_type=jnp.float32)      # (B, Cout)

    # Both classifier heads in one matmul (weights pre-concatenated along N).
    logits_ref[...] = (jnp.dot(feats, wh_ref[...], preferred_element_type=jnp.float32)
                       + bh_ref[...]).astype(logits_ref.dtype)


def fused_backbone_and_heads(x_nhwc, params):
    """x_nhwc: (B,H,W,Cin) f32.  Returns (fmap_flat (B*H*W,Cout) f32, logits (B,N1+N2) f32)."""
    B, H, W, Cin = x_nhwc.shape
    conv_w = params["conv_w"]                       # (3,3,Cin,Cout)
    Cout = conv_w.shape[-1]
    w1, b1 = params["head0_w"], params["head0_b"]   # (Cout,N1), (N1,)
    w2, b2 = params["head1_w"], params["head1_b"]   # (Cout,N2), (N2,)
    N1, N2 = w1.shape[1], w2.shape[1]
    Nh = N1 + N2
    K = 9 * Cin

    # Host-side (XLA) im2col of the zero-padded input: (B*H*W, 9*Cin).
    # Tap order k = ky*3 + kx, channel-minor, matching conv_w.reshape(9*Cin, Cout).
    x_pad = jnp.pad(x_nhwc, ((0, 0), (1, 1), (1, 1), (0, 0)))
    patches = jnp.concatenate(
        [x_pad[:, ky:ky + H, kx:kx + W, :] for ky in range(3) for kx in range(3)],
        axis=-1).reshape(B * H * W, K)

    # bf16 conv operands (halved DMA/VMEM bytes, 2x MXU rate on v6e/v7x);
    # f32 accumulation + f32 bias/ReLU keeps it numerically safe and v5e-safe.
    patches_bf16 = patches.astype(jnp.bfloat16)
    wc = conv_w.reshape(K, Cout).astype(jnp.bfloat16)
    bc = params["conv_b"].reshape(1, Cout).astype(jnp.float32)

    # Concatenate the two head weights/biases -> one matmul, one output store.
    wh = jnp.concatenate([w1, w2], axis=1).astype(jnp.float32)        # (Cout, Nh)
    bh = jnp.concatenate([b1, b2], axis=0).reshape(1, Nh).astype(jnp.float32)

    kernel = partial(_fused_backbone_heads_kernel, batch=B, hw=H * W)
    fmap_flat, logits = pl.pallas_call(
        kernel,
        out_shape=(jax.ShapeDtypeStruct((B * H * W, Cout), jnp.float32),
                   jax.ShapeDtypeStruct((B, Nh), jnp.float32)),
        # Whole problem in one block (no grid): total VMEM footprint < 200 KiB,
        # so per-step pipeline overhead would dominate any tiling at this size.
        in_specs=[
            pl.BlockSpec((B * H * W, K), lambda: (0, 0)),
            pl.BlockSpec((K, Cout), lambda: (0, 0)),
            pl.BlockSpec((1, Cout), lambda: (0, 0)),
            pl.BlockSpec((Cout, Nh), lambda: (0, 0)),
            pl.BlockSpec((1, Nh), lambda: (0, 0)),
        ],
        out_specs=(pl.BlockSpec((B * H * W, Cout), lambda: (0, 0)),
                   pl.BlockSpec((B, Nh), lambda: (0, 0))),
        compiler_params=pltpu.CompilerParams(vmem_limit_bytes=32 << 20),
    )(patches_bf16, wc, bc, wh, bh)
    return fmap_flat, logits


# ----------------------------------------------------------------------------
# FuseModelDefault equivalent
# ----------------------------------------------------------------------------
class FuseModelDefaultPallas:
    """conv_inputs: tuple of (batch_dict key, num_channels); params: dict."""
    # TODO(synk): FuseModelDefault accepts arbitrary backbone/head nn.Modules;
    # this implements a fixed synthetic conv+ReLU backbone and two GAP+Linear heads.

    def __init__(self, conv_inputs, params):
        self.conv_inputs = conv_inputs
        self.params = params

    def __call__(self, batch_dict):
        # torch.cat([...], 1) on NCHW inputs, then NCHW -> NHWC for the TPU kernel.
        conv_input = jnp.concatenate(
            [batch_dict[name] for name, _ in self.conv_inputs], axis=1)
        x_nhwc = jnp.transpose(conv_input, (0, 2, 3, 1)).astype(jnp.float32)
        B, H, W, _ = x_nhwc.shape

        fmap_flat, logits = fused_backbone_and_heads(x_nhwc, self.params)

        # backbone_features in NCHW to match the torch backbone's output convention.
        Cout = self.params["conv_w"].shape[-1]
        backbone_features = jnp.transpose(
            fmap_flat.reshape(B, H, W, Cout), (0, 3, 1, 2))

        n1 = self.params["head0_b"].shape[0]
        # equivalent of returning batch_dict['model']
        return {
            "backbone_features": backbone_features,
            "head_0": {"logits": logits[:, :n1]},
            "head_1": {"logits": logits[:, n1:]},
        }


def _init_params(key, cin, cout, n1, n2):
    k = jax.random.split(key, 6)
    return {
        "conv_w": 0.1 * jax.random.normal(k[0], (3, 3, cin, cout), jnp.float32),
        "conv_b": 0.1 * jax.random.normal(k[1], (cout,), jnp.float32),
        "head0_w": 0.1 * jax.random.normal(k[2], (cout, n1), jnp.float32),
        "head0_b": 0.1 * jax.random.normal(k[3], (n1,), jnp.float32),
        "head1_w": 0.1 * jax.random.normal(k[4], (cout, n2), jnp.float32),
        "head1_b": 0.1 * jax.random.normal(k[5], (n2,), jnp.float32),
    }


if __name__ == "__main__":
    B, H, W = 2, 16, 16
    CIN_A, CIN_B = 2, 2
    COUT, N1, N2 = 32, 3, 5

    key = jax.random.PRNGKey(0)
    k_a, k_b, k_p = jax.random.split(key, 3)

    batch_dict = {
        "data.input.img_a": jax.random.normal(k_a, (B, CIN_A, H, W), jnp.float32),
        "data.input.img_b": jax.random.normal(k_b, (B, CIN_B, H, W), jnp.float32),
    }
    params = _init_params(k_p, CIN_A + CIN_B, COUT, N1, N2)

    model = FuseModelDefaultPallas(
        conv_inputs=(("data.input.img_a", CIN_A), ("data.input.img_b", CIN_B)),
        params=params)

    out = model(batch_dict)
    jax.block_until_ready(out)

    # Sanity check against a pure-JAX f32 reference of the same math.
    # (Kernel runs the conv matmul with bf16 operands + f32 accumulation, so use
    #  tolerances loose enough to absorb bf16 operand quantization.)
    x = jnp.concatenate([batch_dict["data.input.img_a"],
                         batch_dict["data.input.img_b"]], axis=1)
    x_nhwc = jnp.transpose(x, (0, 2, 3, 1))
    ref_fmap = jax.lax.conv_general_dilated(
        x_nhwc, params["conv_w"], (1, 1), "SAME",
        dimension_numbers=("NHWC", "HWIO", "NHWC"),
        precision=jax.lax.Precision.HIGHEST) + params["conv_b"]
    ref_fmap = jnp.maximum(ref_fmap, 0.0)
    ref_feats = ref_fmap.mean(axis=(1, 2))
    ref_l1 = ref_feats @ params["head0_w"] + params["head0_b"]
    ref_l2 = ref_feats @ params["head1_w"] + params["head1_b"]

    assert out["backbone_features"].shape == (B, COUT, H, W)
    got_fmap = jnp.transpose(out["backbone_features"], (0, 2, 3, 1))
    assert jnp.allclose(got_fmap, ref_fmap, atol=5e-2, rtol=5e-2), \
        float(jnp.max(jnp.abs(got_fmap - ref_fmap)))
    assert jnp.allclose(out["head_0"]["logits"], ref_l1, atol=5e-2, rtol=5e-2)
    assert jnp.allclose(out["head_1"]["logits"], ref_l2, atol=5e-2, rtol=5e-2)
    assert out["head_0"]["logits"].shape == (B, N1)
    assert out["head_1"]["logits"].shape == (B, N2)

    print("KERNEL_OK")
</pallas_src>

<mosaic_0001>
module attributes {stable_mosaic.version = 11 : i64} {
  func.func @_fused_backbone_heads_kernel(%arg0: memref<512x36xbf16, #tpu.memory_space<vmem>>, %arg1: memref<36x32xbf16, #tpu.memory_space<vmem>>, %arg2: memref<1x32xf32, #tpu.memory_space<vmem>>, %arg3: memref<32x8xf32, #tpu.memory_space<vmem>>, %arg4: memref<1x8xf32, #tpu.memory_space<vmem>>, %arg5: memref<512x32xf32, #tpu.memory_space<vmem>>, %arg6: memref<2x8xf32, #tpu.memory_space<vmem>>) attributes {dimension_semantics = [], scalar_prefetch = 0 : i64, scratch_operands = 0 : i64, tpu.core_type = #tpu.core_type<tc>} {
    %c0 = arith.constant 0 : index
    %c0_0 = arith.constant 0 : index
    %0 = vector.load %arg0[%c0, %c0_0] : memref<512x36xbf16, #tpu.memory_space<vmem>>, vector<512x36xbf16>
    %c0_1 = arith.constant 0 : index
    %c0_2 = arith.constant 0 : index
    %1 = vector.load %arg1[%c0_1, %c0_2] : memref<36x32xbf16, #tpu.memory_space<vmem>>, vector<36x32xbf16>
    %cst = arith.constant dense<0.000000e+00> : vector<512x32xf32>
    %2 = tpu.matmul %0, %1, %cst {dimension_numbers = #tpu.dot_dimension_numbers<[1], [0], [0], [1], [0, 0, 1, 1], [], []>} : vector<512x36xbf16>, vector<36x32xbf16>, vector<512x32xf32> -> vector<512x32xf32>
    %c0_3 = arith.constant 0 : index
    %c0_4 = arith.constant 0 : index
    %3 = vector.load %arg2[%c0_3, %c0_4] : memref<1x32xf32, #tpu.memory_space<vmem>>, vector<1x32xf32>
    %4 = vector.broadcast %3 : vector<1x32xf32> to vector<512x32xf32>
    %5 = arith.addf %2, %4 : vector<512x32xf32>
    %cst_5 = arith.constant 0.000000e+00 : f32
    %6 = vector.broadcast %cst_5 : f32 to vector<512x32xf32>
    %7 = arith.maximumf %5, %6 : vector<512x32xf32>
    %c0_6 = arith.constant 0 : index
    %c0_7 = arith.constant 0 : index
    %8 = vector.load %arg5[%c0_6, %c0_7] : memref<512x32xf32, #tpu.memory_space<vmem>>, vector<512x32xf32>
    tpu.vector_store %arg5[%c0_6, %c0_7], %7 {strides = array<i32>} : memref<512x32xf32, #tpu.memory_space<vmem>>, vector<512x32xf32>,
    %9 = tpu.iota {dimensions = array<i32: 1>} : vector<2x512xi32>
    %10 = tpu.iota {dimensions = array<i32: 0>} : vector<2x512xi32>
    %c256_i32 = arith.constant 256 : i32
    %11 = vector.broadcast %c256_i32 : i32 to vector<2x512xi32>
    %12 = arith.muli %10, %11 : vector<2x512xi32>
    %13 = arith.cmpi sge, %9, %12 : vector<2x512xi32>
    %c256_i32_8 = arith.constant 256 : i32
    %14 = vector.broadcast %c256_i32_8 : i32 to vector<2x512xi32>
    %15 = arith.addi %12, %14 : vector<2x512xi32>
    %16 = arith.cmpi slt, %9, %15 : vector<2x512xi32>
    %17 = arith.andi %13, %16 : vector<2x512xi1>
    %cst_9 = arith.constant 3.906250e-03 : f32
    %cst_10 = arith.constant 0.000000e+00 : f32
    %18 = vector.broadcast %cst_9 : f32 to vector<2x512xf32>
    %19 = vector.broadcast %cst_10 : f32 to vector<2x512xf32>
    %20 = arith.select %17, %18, %19 : vector<2x512xi1>, vector<2x512xf32>
    %cst_11 = arith.constant dense<0.000000e+00> : vector<2x32xf32>
    %21 = tpu.matmul %20, %7, %cst_11 {dimension_numbers = #tpu.dot_dimension_numbers<[1], [0], [0], [1], [0, 0, 1, 1], [], []>} : vector<2x512xf32>, vector<512x32xf32>, vector<2x32xf32> -> vector<2x32xf32>
    %c0_12 = arith.constant 0 : index
    %c0_13 = arith.constant 0 : index
    %22 = vector.load %arg3[%c0_12, %c0_13] : memref<32x8xf32, #tpu.memory_space<vmem>>, vector<32x8xf32>
    %cst_14 = arith.constant dense<0.000000e+00> : vector<2x8xf32>
    %23 = tpu.matmul %21, %22, %cst_14 {dimension_numbers = #tpu.dot_dimension_numbers<[1], [0], [0], [1], [0, 0, 1, 1], [], []>} : vector<2x32xf32>, vector<32x8xf32>, vector<2x8xf32> -> vector<2x8xf32>
    %c0_15 = arith.constant 0 : index
    %c0_16 = arith.constant 0 : index
    %24 = vector.load %arg4[%c0_15, %c0_16] : memref<1x8xf32, #tpu.memory_space<vmem>>, vector<1x8xf32>
    %25 = vector.broadcast %24 : vector<1x8xf32> to vector<2x8xf32>
    %26 = arith.addf %23, %25 : vector<2x8xf32>
    %c0_17 = arith.constant 0 : index
    %c0_18 = arith.constant 0 : index
    %27 = vector.load %arg6[%c0_17, %c0_18] : memref<2x8xf32, #tpu.memory_space<vmem>>, vector<2x8xf32>
    tpu.vector_store %arg6[%c0_17, %c0_18], %26 {strides = array<i32>} : memref<2x8xf32, #tpu.memory_space<vmem>>, vector<2x8xf32>,
    return
  }
}

</mosaic_0001>

<llo_original>
// kernel: tpu_custom_call.1
$region0: #{tpu_custom_call.1}
  #allocation0 [shape = 'u32[]', space=smem, size = 0x4, offset = 0x4, fixed_abs, tag = 'smem constant byte address 0x4 - core index']
  #allocation1 [shape = 'u32[72,128]{1,0:T(1,128)}', space=vmem, size = 0x9000, scoped, tag = 'internal scratch']
  %s0 = inlined_call_operand.vmem [shape: bf16[512,36], index: 0, kind: input, shape index: {}]
  %s1 = inlined_call_operand.vmem [shape: bf16[36,32], index: 1, kind: input, shape index: {}]
  %s2 = inlined_call_operand.vmem [shape: f32[1,32], index: 2, kind: input, shape index: {}]
  %s3 = inlined_call_operand.vmem [shape: f32[32,8], index: 3, kind: input, shape index: {}]
  %s4 = inlined_call_operand.vmem [shape: f32[1,8], index: 4, kind: input, shape index: {}]
  %s5 = inlined_call_operand.vmem [shape: f32[512,32], index: 5, kind: output, shape index: {0}]
  %s6 = inlined_call_operand.hbm [shape: f32[2,8], index: 6, kind: output, shape index: {1}]
  %7 = xla_tuple %s5, %s6
  %s8 = sld [smem:[#allocation0]]
  $region38: #{tpu_custom_call.1} parent=0
    _
  %s10 = ssub.s32 1, %s8
  %s11 = scalar_select 0, %s10, %s8
  $region1: #{tpu_custom_call.1} parent=0
    #allocation2 [shape = 'u8[1024]{0}', space=vmem, size = 0x400, scoped, tag = 'output window, operand 1, single buffered']
    #allocation3 [shape = 's32[1]{0}', space=sflag, size = 0x4, scoped, tag = 'scoped memory for tpu_custom_call.1']
    %12 = vsyncpa [#allocation3], 0
    // Predicated region
    $region2: #{tpu_custom_call.1} parent=1 // pred_check
      _
    $region3: #{tpu_custom_call.1} parent=1 // pred_check_branch
      %14 = sbr.rel (0) target = $region5
    $region4: #{tpu_custom_call.1} parent=1 // pred_region
      _
    $region5: #{tpu_custom_call.1} parent=1 // pred_fallthru
      _
    // Predicated region
    $region6: #{tpu_custom_call.1} parent=1 // pred_check
      _
    $region7: #{tpu_custom_call.1} parent=1 // pred_check_branch
      %16 = sbr.rel (0) target = $region9
    $region8: #{tpu_custom_call.1} parent=1 // pred_region
      _
    $region9: #{tpu_custom_call.1} parent=1 // pred_fallthru
      _
    // Predicated region
    $region10: #{tpu_custom_call.1} parent=1 // pred_check
      _
    $region11: #{tpu_custom_call.1} parent=1 // pred_check_branch
      %18 = sbr.rel (0) target = $region13
    $region12: #{tpu_custom_call.1} parent=1 // pred_region
      _
    $region13: #{tpu_custom_call.1} parent=1 // pred_fallthru
      _
    // Predicated region
    $region14: #{tpu_custom_call.1} parent=1 // pred_check
      _
    $region15: #{tpu_custom_call.1} parent=1 // pred_check_branch
      %20 = sbr.rel (0) target = $region17
    $region16: #{tpu_custom_call.1} parent=1 // pred_region
      _
    $region17: #{tpu_custom_call.1} parent=1 // pred_fallthru
      _
    // Predicated region
    $region18: #{tpu_custom_call.1} parent=1 // pred_check
      _
    $region19: #{tpu_custom_call.1} parent=1 // pred_check_branch
      %22 = sbr.rel (0) target = $region21
    $region20: #{tpu_custom_call.1} parent=1 // pred_region
      _
    $region21: #{tpu_custom_call.1} parent=1 // pred_fallthru
      _
    %v24 = vld [vmem:[%s0] sm:$0xf]
    %v25 = vld [vmem:[%s0 + $0x4] sm:$0xf]
    %v26 = vld [vmem:[%s0 + $0x8] sm:$0xf]
    %v27 = vld [vmem:[%s0 + $0xc] sm:$0xf]
    %v28 = vld [vmem:[%s0 + $0x10] sm:$0xf]
    %v29 = vld [vmem:[%s0 + $0x14] sm:$0xf]
    %v30 = vld [vmem:[%s0 + $0x18] sm:$0xf]
    %v31 = vld [vmem:[%s0 + $0x1c] sm:$0xf]
    %v32 = vld [vmem:[%s0 + $0x20] sm:$0xf]
    %v33 = vld [vmem:[%s0 + $0x24] sm:$0xf]
    %v34 = vld [vmem:[%s0 + $0x28] sm:$0xf]
    %v35 = vld [vmem:[%s0 + $0x2c] sm:$0xf]
    %v36 = vld [vmem:[%s0 + $0x30] sm:$0xf]
    %v37 = vld [vmem:[%s0 + $0x34] sm:$0xf]
    %v38 = vld [vmem:[%s0 + $0x38] sm:$0xf]
    %v39 = vld [vmem:[%s0 + $0x3c] sm:$0xf]
    %v40 = vld [vmem:[%s0 + $0x40] sm:$0xf]
    %v41 = vld [vmem:[%s0 + $0x44] sm:$0xf]
    %v42 = vld [vmem:[%s0 + $0x48] sm:$0xf]
    %v43 = vld [vmem:[%s0 + $0x4c] sm:$0xf]
    %v44 = vld [vmem:[%s0 + $0x50] sm:$0xf]
    %v45 = vld [vmem:[%s0 + $0x54] sm:$0xf]
    %v46 = vld [vmem:[%s0 + $0x58] sm:$0xf]
    %v47 = vld [vmem:[%s0 + $0x5c] sm:$0xf]
    %v48 = vld [vmem:[%s0 + $0x60] sm:$0xf]
    %v49 = vld [vmem:[%s0 + $0x64] sm:$0xf]
    %v50 = vld [vmem:[%s0 + $0x68] sm:$0xf]
    %v51 = vld [vmem:[%s0 + $0x6c] sm:$0xf]
    %v52 = vld [vmem:[%s0 + $0x70] sm:$0xf]
    %v53 = vld [vmem:[%s0 + $0x74] sm:$0xf]
    %v54 = vld [vmem:[%s0 + $0x78] sm:$0xf]
    %v55 = vld [vmem:[%s0 + $0x7c] sm:$0xf]
    %v56 = vld [vmem:[%s0 + $0x80] sm:$0xf]
    %v57 = vld [vmem:[%s0 + $0x84] sm:$0xf]
    %v58 = vld [vmem:[%s0 + $0x88] sm:$0xf]
    %v59 = vld [vmem:[%s0 + $0x8c] sm:$0xf]
    %v60 = vld [vmem:[%s0 + $0x90] sm:$0xf]
    %v61 = vld [vmem:[%s0 + $0x94] sm:$0xf]
    %v62 = vld [vmem:[%s0 + $0x98] sm:$0xf]
    %v63 = vld [vmem:[%s0 + $0x9c] sm:$0xf]
    %v64 = vld [vmem:[%s0 + $0xa0] sm:$0xf]
    %v65 = vld [vmem:[%s0 + $0xa4] sm:$0xf]
    %v66 = vld [vmem:[%s0 + $0xa8] sm:$0xf]
    %v67 = vld [vmem:[%s0 + $0xac] sm:$0xf]
    %v68 = vld [vmem:[%s0 + $0xb0] sm:$0xf]
    %v69 = vld [vmem:[%s0 + $0xb4] sm:$0xf]
    %v70 = vld [vmem:[%s0 + $0xb8] sm:$0xf]
    %v71 = vld [vmem:[%s0 + $0xbc] sm:$0xf]
    %v72 = vld [vmem:[%s0 + $0xc0] sm:$0xf]
    %v73 = vld [vmem:[%s0 + $0xc4] sm:$0xf]
    %v74 = vld [vmem:[%s0 + $0xc8] sm:$0xf]
    %v75 = vld [vmem:[%s0 + $0xcc] sm:$0xf]
    %v76 = vld [vmem:[%s0 + $0xd0] sm:$0xf]
    %v77 = vld [vmem:[%s0 + $0xd4] sm:$0xf]
    %v78 = vld [vmem:[%s0 + $0xd8] sm:$0xf]
    %v79 = vld [vmem:[%s0 + $0xdc] sm:$0xf]
    %v80 = vld [vmem:[%s0 + $0xe0] sm:$0xf]
    %v81 = vld [vmem:[%s0 + $0xe4] sm:$0xf]
    %v82 = vld [vmem:[%s0 + $0xe8] sm:$0xf]
    %v83 = vld [vmem:[%s0 + $0xec] sm:$0xf]
    %v84 = vld [vmem:[%s0 + $0xf0] sm:$0xf]
    %v85 = vld [vmem:[%s0 + $0xf4] sm:$0xf]
    %v86 = vld [vmem:[%s0 + $0xf8] sm:$0xf]
    %v87 = vld [vmem:[%s0 + $0xfc] sm:$0xf]
    %v88 = vld [vmem:[%s1] sm:$0xf]
    %v89 = vld [vmem:[%s1 + $0x4] sm:$0xf]
    %v90 = vld [vmem:[%s1 + $0x8] sm:$0xf]
    %v91 = vld [vmem:[%s1 + $0xc] sm:$0xf]
    %v92 = vld [vmem:[%s1 + $0x10] sm:$0x3]
    %v93 = vld [vmem:[%s2] sm:$0x1]
    %v95 = vperm.slane %v93, 0
    %v161 = vunpack.c.l.b16 %v24
    %v162 = vunpack.c.l.b16 %v25
    %v163 = vunpack.c.l.b16 %v26
    %v164 = vunpack.c.l.b16 %v27
    %v165 = vunpack.c.l.b16 %v28
    %v166 = vunpack.c.l.b16 %v29
    %v167 = vunpack.c.l.b16 %v30
    %v168 = vunpack.c.l.b16 %v31
    %v169 = vunpack.c.l.b16 %v32
    %v170 = vunpack.c.l.b16 %v33
    %v171 = vunpack.c.l.b16 %v34
    %v172 = vunpack.c.l.b16 %v35
    %v173 = vunpack.c.l.b16 %v36
    %v174 = vunpack.c.l.b16 %v37
    %v175 = vunpack.c.l.b16 %v38
    %v176 = vunpack.c.l.b16 %v39
    %v177 = vunpack.c.l.b16 %v40
    %v178 = vunpack.c.l.b16 %v41
    %v179 = vunpack.c.l.b16 %v42
    %v180 = vunpack.c.l.b16 %v43
    %v181 = vunpack.c.l.b16 %v44
    %v182 = vunpack.c.l.b16 %v45
    %v183 = vunpack.c.l.b16 %v46
    %v184 = vunpack.c.l.b16 %v47
    %v185 = vunpack.c.l.b16 %v48
    %v186 = vunpack.c.l.b16 %v49
    %v187 = vunpack.c.l.b16 %v50
    %v188 = vunpack.c.l.b16 %v51
    %v189 = vunpack.c.l.b16 %v52
    %v190 = vunpack.c.l.b16 %v53
    %v191 = vunpack.c.l.b16 %v54
    %v192 = vunpack.c.l.b16 %v55
    %v193 = vunpack.c.l.b16 %v56
    %v194 = vunpack.c.l.b16 %v57
    %v195 = vunpack.c.l.b16 %v58
    %v196 = vunpack.c.l.b16 %v59
    %v197 = vunpack.c.l.b16 %v60
    %v198 = vunpack.c.l.b16 %v61
    %v199 = vunpack.c.l.b16 %v62
    %v200 = vunpack.c.l.b16 %v63
    %v201 = vunpack.c.l.b16 %v64
    %v202 = vunpack.c.l.b16 %v65
    %v203 = vunpack.c.l.b16 %v66
    %v204 = vunpack.c.l.b16 %v67
    %v205 = vunpack.c.l.b16 %v68
    %v206 = vunpack.c.l.b16 %v69
    %v207 = vunpack.c.l.b16 %v70
    %v208 = vunpack.c.l.b16 %v71
    %v209 = vunpack.c.l.b16 %v72
    %v210 = vunpack.c.l.b16 %v73
    %v211 = vunpack.c.l.b16 %v74
    %v212 = vunpack.c.l.b16 %v75
    %v213 = vunpack.c.l.b16 %v76
    %v214 = vunpack.c.l.b16 %v77
    %v215 = vunpack.c.l.b16 %v78
    %v216 = vunpack.c.l.b16 %v79
    %v217 = vunpack.c.l.b16 %v80
    %v218 = vunpack.c.l.b16 %v81
    %v219 = vunpack.c.l.b16 %v82
    %v220 = vunpack.c.l.b16 %v83
    %v221 = vunpack.c.l.b16 %v84
    %v222 = vunpack.c.l.b16 %v85
    %v223 = vunpack.c.l.b16 %v86
    %v224 = vunpack.c.l.b16 %v87
    %v225 = vpack.c.b16 %v162, %v161
    %v226 = vpack.c.b16 %v164, %v163
    %v227 = vpack.c.b16 %v166, %v165
    %v228 = vpack.c.b16 %v168, %v167
    %v229 = vpack.c.b16 %v170, %v169
    %v230 = vpack.c.b16 %v172, %v171
    %v231 = vpack.c.b16 %v174, %v173
    %v232 = vpack.c.b16 %v176, %v175
    %v233 = vpack.c.b16 %v178, %v177
    %v234 = vpack.c.b16 %v180, %v179
    %v235 = vpack.c.b16 %v182, %v181
    %v236 = vpack.c.b16 %v184, %v183
    %v237 = vpack.c.b16 %v186, %v185
    %v238 = vpack.c.b16 %v188, %v187
    %v239 = vpack.c.b16 %v190, %v189
    %v240 = vpack.c.b16 %v192, %v191
    %v241 = vpack.c.b16 %v194, %v193
    %v242 = vpack.c.b16 %v196, %v195
    %v243 = vpack.c.b16 %v198, %v197
    %v244 = vpack.c.b16 %v200, %v199
    %v245 = vpack.c.b16 %v202, %v201
    %v246 = vpack.c.b16 %v204, %v203
    %v247 = vpack.c.b16 %v206, %v205
    %v248 = vpack.c.b16 %v208, %v207
    %v249 = vpack.c.b16 %v210, %v209
    %v250 = vpack.c.b16 %v212, %v211
    %v251 = vpack.c.b16 %v214, %v213
    %v252 = vpack.c.b16 %v216, %v215
    %v253 = vpack.c.b16 %v218, %v217
    %v254 = vpack.c.b16 %v220, %v219
    %v255 = vpack.c.b16 %v222, %v221
    %v256 = vpack.c.b16 %v224, %v223
    %v262 = vunpack.c.l.b16 %v88
    %v263 = vunpack.c.l.b16 %v89
    %v264 = vunpack.c.l.b16 %v90
    %v265 = vunpack.c.l.b16 %v91
    %v266 = vunpack.c.l.b16 %v92
    %v267 = vpack.c.b16 %v263, %v262
    %v268 = vpack.c.b16 %v265, %v264
    %v269 = vpack.c.b16 %v266, %v266
    %vm272 = vcmask 293888
    %v274 = vsel %vm272, %v225, 0
    %v277 = vsel %vm272, %v226, 0
    %v280 = vsel %vm272, %v227, 0
    %v283 = vsel %vm272, %v228, 0
    %v286 = vsel %vm272, %v229, 0
    %v289 = vsel %vm272, %v230, 0
    %v292 = vsel %vm272, %v231, 0
    %v295 = vsel %vm272, %v232, 0
    %v298 = vsel %vm272, %v233, 0
    %v301 = vsel %vm272, %v234, 0
    %v304 = vsel %vm272, %v235, 0
    %v307 = vsel %vm272, %v236, 0
    %v310 = vsel %vm272, %v237, 0
    %v313 = vsel %vm272, %v238, 0
    %v316 = vsel %vm272, %v239, 0
    %v319 = vsel %vm272, %v240, 0
    %v322 = vsel %vm272, %v241, 0
    %v325 = vsel %vm272, %v242, 0
    %v328 = vsel %vm272, %v243, 0
    %v331 = vsel %vm272, %v244, 0
    %v334 = vsel %vm272, %v245, 0
    %v337 = vsel %vm272, %v246, 0
    %v340 = vsel %vm272, %v247, 0
    %v343 = vsel %vm272, %v248, 0
    %v346 = vsel %vm272, %v249, 0
    %v349 = vsel %vm272, %v250, 0
    %v352 = vsel %vm272, %v251, 0
    %v355 = vsel %vm272, %v252, 0
    %v358 = vsel %vm272, %v253, 0
    %v361 = vsel %vm272, %v254, 0
    %v364 = vsel %vm272, %v255, 0
    %v367 = vsel %vm272, %v256, 0
    %vm369 = vcmask 1041408
    %v371 = vsel %vm369, %v269, 0
    %373 = vmatpush.bf16.msra.mxu0 0
    %374 = vmatpush.bf16.msra.mxu0 0
    %375 = vmatpush.bf16.msra.mxu0 0
    %376 = vmatpush.bf16.msra.mxu0 0
    %377 = vmatpush.bf16.msra.mxu0 0
    %378 = vmatpush.bf16.msra.mxu0 %v371
    %379 = vmatpush.bf16.msra.mxu0 %v268
    %380 = vmatpush.bf16.msra.mxu0 %v267
    %381 = vmatmul.bf16.gmra.mxu0 %v274
    %v382 = vpop.f32.mrf.mxu0
    %v383 = vadd.f32 %v95, %v382
    %v384 = vpop.f32.mrf.mxu0
    %v385 = vadd.f32 %v95, %v384
    %386 = vmatmul.bf16.gmra.mxu0 %v277
    %v387 = vpop.f32.mrf.mxu0
    %v388 = vadd.f32 %v95, %v387
    %v389 = vpop.f32.mrf.mxu0
    %v390 = vadd.f32 %v95, %v389
    %391 = vmatmul.bf16.gmra.mxu0 %v280
    %v392 = vpop.f32.mrf.mxu0
    %v393 = vadd.f32 %v95, %v392
    %v394 = vpop.f32.mrf.mxu0
    %v395 = vadd.f32 %v95, %v394
    %396 = vmatmul.bf16.gmra.mxu0 %v283
    %v397 = vpop.f32.mrf.mxu0
    %v398 = vadd.f32 %v95, %v397
    %v399 = vpop.f32.mrf.mxu0
    %v400 = vadd.f32 %v95, %v399
    %401 = vmatmul.bf16.gmra.mxu0 %v286
    %v402 = vpop.f32.mrf.mxu0
    %v403 = vadd.f32 %v95, %v402
    %v404 = vpop.f32.mrf.mxu0
    %v405 = vadd.f32 %v95, %v404
    %406 = vmatmul.bf16.gmra.mxu0 %v289
    %v407 = vpop.f32.mrf.mxu0
    %v408 = vadd.f32 %v95, %v407
    %v409 = vpop.f32.mrf.mxu0
    %v410 = vadd.f32 %v95, %v409
    %411 = vmatmul.bf16.gmra.mxu0 %v292
    %v412 = vpop.f32.mrf.mxu0
    %v413 = vadd.f32 %v95, %v412
    %v414 = vpop.f32.mrf.mxu0
    %v415 = vadd.f32 %v95, %v414
    %416 = vmatmul.bf16.gmra.mxu0 %v295
    %v417 = vpop.f32.mrf.mxu0
    %v418 = vadd.f32 %v95, %v417
    %v419 = vpop.f32.mrf.mxu0
    %v420 = vadd.f32 %v95, %v419
    %421 = vmatmul.bf16.gmra.mxu0 %v298
    %v422 = vpop.f32.mrf.mxu0
    %v423 = vadd.f32 %v95, %v422
    %v424 = vpop.f32.mrf.mxu0
    %v425 = vadd.f32 %v95, %v424
    %426 = vmatmul.bf16.gmra.mxu0 %v301
    %v427 = vpop.f32.mrf.mxu0
    %v428 = vadd.f32 %v95, %v427
    %v429 = vpop.f32.mrf.mxu0
    %v430 = vadd.f32 %v95, %v429
    %431 = vmatmul.bf16.gmra.mxu0 %v304
    %v432 = vpop.f32.mrf.mxu0
    %v433 = vadd.f32 %v95, %v432
    %v434 = vpop.f32.mrf.mxu0
    %v435 = vadd.f32 %v95, %v434
    %436 = vmatmul.bf16.gmra.mxu0 %v307
    %v437 = vpop.f32.mrf.mxu0
    %v438 = vadd.f32 %v95, %v437
    %v439 = vpop.f32.mrf.mxu0
    %v440 = vadd.f32 %v95, %v439
    %441 = vmatmul.bf16.gmra.mxu0 %v310
    %v442 = vpop.f32.mrf.mxu0
    %v443 = vadd.f32 %v95, %v442
    %v444 = vpop.f32.mrf.mxu0
    %v445 = vadd.f32 %v95, %v444
    %446 = vmatmul.bf16.gmra.mxu0 %v313
    %v447 = vpop.f32.mrf.mxu0
    %v448 = vadd.f32 %v95, %v447
    %v449 = vpop.f32.mrf.mxu0
    %v450 = vadd.f32 %v95, %v449
    %451 = vmatmul.bf16.gmra.mxu0 %v316
    %v452 = vpop.f32.mrf.mxu0
    %v453 = vadd.f32 %v95, %v452
    %v454 = vpop.f32.mrf.mxu0
    %v455 = vadd.f32 %v95, %v454
    %456 = vmatmul.bf16.gmra.mxu0 %v319
    %v457 = vpop.f32.mrf.mxu0
    %v458 = vadd.f32 %v95, %v457
    %v459 = vpop.f32.mrf.mxu0
    %v460 = vadd.f32 %v95, %v459
    %461 = vmatmul.bf16.gmra.mxu0 %v322
    %v462 = vpop.f32.mrf.mxu0
    %v463 = vadd.f32 %v95, %v462
    %v464 = vpop.f32.mrf.mxu0
    %v465 = vadd.f32 %v95, %v464
    %466 = vmatmul.bf16.gmra.mxu0 %v325
    %v467 = vpop.f32.mrf.mxu0
    %v468 = vadd.f32 %v95, %v467
    %v469 = vpop.f32.mrf.mxu0
    %v470 = vadd.f32 %v95, %v469
    %471 = vmatmul.bf16.gmra.mxu0 %v328
    %v472 = vpop.f32.mrf.mxu0
    %v473 = vadd.f32 %v95, %v472
    %v474 = vpop.f32.mrf.mxu0
    %v475 = vadd.f32 %v95, %v474
    %476 = vmatmul.bf16.gmra.mxu0 %v331
    %v477 = vpop.f32.mrf.mxu0
    %v478 = vadd.f32 %v95, %v477
    %v479 = vpop.f32.mrf.mxu0
    %v480 = vadd.f32 %v95, %v479
    %481 = vmatmul.bf16.gmra.mxu0 %v334
    %v482 = vpop.f32.mrf.mxu0
    %v483 = vadd.f32 %v95, %v482
    %v484 = vpop.f32.mrf.mxu0
    %v485 = vadd.f32 %v95, %v484
    %486 = vmatmul.bf16.gmra.mxu0 %v337
    %v487 = vpop.f32.mrf.mxu0
    %v488 = vadd.f32 %v95, %v487
    %v489 = vpop.f32.mrf.mxu0
    %v490 = vadd.f32 %v95, %v489
    %491 = vmatmul.bf16.gmra.mxu0 %v340
    %v492 = vpop.f32.mrf.mxu0
    %v493 = vadd.f32 %v95, %v492
    %v494 = vpop.f32.mrf.mxu0
    %v495 = vadd.f32 %v95, %v494
    %496 = vmatmul.bf16.gmra.mxu0 %v343
    %v497 = vpop.f32.mrf.mxu0
    %v498 = vadd.f32 %v95, %v497
    %v499 = vpop.f32.mrf.mxu0
    %v500 = vadd.f32 %v95, %v499
    %501 = vmatmul.bf16.gmra.mxu0 %v346
    %v502 = vpop.f32.mrf.mxu0
    %v503 = vadd.f32 %v95, %v502
    %v504 = vpop.f32.mrf.mxu0
    %v505 = vadd.f32 %v95, %v504
    %506 = vmatmul.bf16.gmra.mxu0 %v349
    %v507 = vpop.f32.mrf.mxu0
    %v508 = vadd.f32 %v95, %v507
    %v509 = vpop.f32.mrf.mxu0
    %v510 = vadd.f32 %v95, %v509
    %511 = vmatmul.bf16.gmra.mxu0 %v352
    %v512 = vpop.f32.mrf.mxu0
    %v513 = vadd.f32 %v95, %v512
    %v514 = vpop.f32.mrf.mxu0
    %v515 = vadd.f32 %v95, %v514
    %516 = vmatmul.bf16.gmra.mxu0 %v355
    %v517 = vpop.f32.mrf.mxu0
    %v518 = vadd.f32 %v95, %v517
    %v519 = vpop.f32.mrf.mxu0
    %v520 = vadd.f32 %v95, %v519
    %521 = vmatmul.bf16.gmra.mxu0 %v358
    %v522 = vpop.f32.mrf.mxu0
    %v523 = vadd.f32 %v95, %v522
    %v524 = vpop.f32.mrf.mxu0
    %v525 = vadd.f32 %v95, %v524
    %526 = vmatmul.bf16.gmra.mxu0 %v361
    %v527 = vpop.f32.mrf.mxu0
    %v528 = vadd.f32 %v95, %v527
    %v529 = vpop.f32.mrf.mxu0
    %v530 = vadd.f32 %v95, %v529
    %531 = vmatmul.bf16.gmra.mxu0 %v364
    %v532 = vpop.f32.mrf.mxu0
    %v533 = vadd.f32 %v95, %v532
    %v534 = vpop.f32.mrf.mxu0
    %v535 = vadd.f32 %v95, %v534
    %536 = vmatmul.bf16.gmra.mxu0 %v367
    %v537 = vpop.f32.mrf.mxu0
    %v538 = vadd.f32 %v95, %v537
    %v539 = vpop.f32.mrf.mxu0
    %v540 = vadd.f32 %v95, %v539
    %541 = vdwg.mxu0
    %v542 = vmax.f32 %v383, 0.0
    %v543 = vmax.f32 %v385, 0.0
    %v544 = vmax.f32 %v388, 0.0
    %v545 = vmax.f32 %v390, 0.0
    %v546 = vmax.f32 %v393, 0.0
    %v547 = vmax.f32 %v395, 0.0
    %v548 = vmax.f32 %v398, 0.0
    %v549 = vmax.f32 %v400, 0.0
    %v550 = vmax.f32 %v403, 0.0
    %v551 = vmax.f32 %v405, 0.0
    %v552 = vmax.f32 %v408, 0.0
    %v553 = vmax.f32 %v410, 0.0
    %v554 = vmax.f32 %v413, 0.0
    %v555 = vmax.f32 %v415, 0.0
    %v556 = vmax.f32 %v418, 0.0
    %v557 = vmax.f32 %v420, 0.0
    %v558 = vmax.f32 %v423, 0.0
    %v559 = vmax.f32 %v425, 0.0
    %v560 = vmax.f32 %v428, 0.0
    %v561 = vmax.f32 %v430, 0.0
    %v562 = vmax.f32 %v433, 0.0
    %v563 = vmax.f32 %v435, 0.0
    %v564 = vmax.f32 %v438, 0.0
    %v565 = vmax.f32 %v440, 0.0
    %v566 = vmax.f32 %v443, 0.0
    %v567 = vmax.f32 %v445, 0.0
    %v568 = vmax.f32 %v448, 0.0
    %v569 = vmax.f32 %v450, 0.0
    %v570 = vmax.f32 %v453, 0.0
    %v571 = vmax.f32 %v455, 0.0
    %v572 = vmax.f32 %v458, 0.0
    %v573 = vmax.f32 %v460, 0.0
    %v574 = vmax.f32 %v463, 0.0
    %v575 = vmax.f32 %v465, 0.0
    %v576 = vmax.f32 %v468, 0.0
    %v577 = vmax.f32 %v470, 0.0
    %v578 = vmax.f32 %v473, 0.0
    %v579 = vmax.f32 %v475, 0.0
    %v580 = vmax.f32 %v478, 0.0
    %v581 = vmax.f32 %v480, 0.0
    %v582 = vmax.f32 %v483, 0.0
    %v583 = vmax.f32 %v485, 0.0
    %v584 = vmax.f32 %v488, 0.0
    %v585 = vmax.f32 %v490, 0.0
    %v586 = vmax.f32 %v493, 0.0
    %v587 = vmax.f32 %v495, 0.0
    %v588 = vmax.f32 %v498, 0.0
    %v589 = vmax.f32 %v500, 0.0
    %v590 = vmax.f32 %v503, 0.0
    %v591 = vmax.f32 %v505, 0.0
    %v592 = vmax.f32 %v508, 0.0
    %v593 = vmax.f32 %v510, 0.0
    %v594 = vmax.f32 %v513, 0.0
    %v595 = vmax.f32 %v515, 0.0
    %v596 = vmax.f32 %v518, 0.0
    %v597 = vmax.f32 %v520, 0.0
    %v598 = vmax.f32 %v523, 0.0
    %v599 = vmax.f32 %v525, 0.0
    %v600 = vmax.f32 %v528, 0.0
    %v601 = vmax.f32 %v530, 0.0
    %v602 = vmax.f32 %v533, 0.0
    %v603 = vmax.f32 %v535, 0.0
    %v604 = vmax.f32 %v538, 0.0
    %v605 = vmax.f32 %v540, 0.0
    %vm606 = vcmask 261120
    %607 = vst.msk [vmem:[%s5] sm:$0xff] %vm606, %v542
    %608 = vst.msk [vmem:[%s5 + $0x8] sm:$0xff] %vm606, %v543
    %609 = vst.msk [vmem:[%s5 + $0x10] sm:$0xff] %vm606, %v544
    %610 = vst.msk [vmem:[%s5 + $0x18] sm:$0xff] %vm606, %v545
    %611 = vst.msk [vmem:[%s5 + $0x20] sm:$0xff] %vm606, %v546
    %612 = vst.msk [vmem:[%s5 + $0x28] sm:$0xff] %vm606, %v547
    %613 = vst.msk [vmem:[%s5 + $0x30] sm:$0xff] %vm606, %v548
    %614 = vst.msk [vmem:[%s5 + $0x38] sm:$0xff] %vm606, %v549
    %615 = vst.msk [vmem:[%s5 + $0x40] sm:$0xff] %vm606, %v550
    %616 = vst.msk [vmem:[%s5 + $0x48] sm:$0xff] %vm606, %v551
    %617 = vst.msk [vmem:[%s5 + $0x50] sm:$0xff] %vm606, %v552
    %618 = vst.msk [vmem:[%s5 + $0x58] sm:$0xff] %vm606, %v553
    %619 = vst.msk [vmem:[%s5 + $0x60] sm:$0xff] %vm606, %v554
    %620 = vst.msk [vmem:[%s5 + $0x68] sm:$0xff] %vm606, %v555
    %621 = vst.msk [vmem:[%s5 + $0x70] sm:$0xff] %vm606, %v556
    %622 = vst.msk [vmem:[%s5 + $0x78] sm:$0xff] %vm606, %v557
    %623 = vst.msk [vmem:[%s5 + $0x80] sm:$0xff] %vm606, %v558
    %624 = vst.msk [vmem:[%s5 + $0x88] sm:$0xff] %vm606, %v559
    %625 = vst.msk [vmem:[%s5 + $0x90] sm:$0xff] %vm606, %v560
    %626 = vst.msk [vmem:[%s5 + $0x98] sm:$0xff] %vm606, %v561
    %627 = vst.msk [vmem:[%s5 + $0xa0] sm:$0xff] %vm606, %v562
    %628 = vst.msk [vmem:[%s5 + $0xa8] sm:$0xff] %vm606, %v563
    %629 = vst.msk [vmem:[%s5 + $0xb0] sm:$0xff] %vm606, %v564
    %630 = vst.msk [vmem:[%s5 + $0xb8] sm:$0xff] %vm606, %v565
    %631 = vst.msk [vmem:[%s5 + $0xc0] sm:$0xff] %vm606, %v566
    %632 = vst.msk [vmem:[%s5 + $0xc8] sm:$0xff] %vm606, %v567
    %633 = vst.msk [vmem:[%s5 + $0xd0] sm:$0xff] %vm606, %v568
    %634 = vst.msk [vmem:[%s5 + $0xd8] sm:$0xff] %vm606, %v569
    %635 = vst.msk [vmem:[%s5 + $0xe0] sm:$0xff] %vm606, %v570
    %636 = vst.msk [vmem:[%s5 + $0xe8] sm:$0xff] %vm606, %v571
    %637 = vst.msk [vmem:[%s5 + $0xf0] sm:$0xff] %vm606, %v572
    %638 = vst.msk [vmem:[%s5 + $0xf8] sm:$0xff] %vm606, %v573
    %639 = vst.msk [vmem:[%s5 + $0x100] sm:$0xff] %vm606, %v574
    %640 = vst.msk [vmem:[%s5 + $0x108] sm:$0xff] %vm606, %v575
    %641 = vst.msk [vmem:[%s5 + $0x110] sm:$0xff] %vm606, %v576
    %642 = vst.msk [vmem:[%s5 + $0x118] sm:$0xff] %vm606, %v577
    %643 = vst.msk [vmem:[%s5 + $0x120] sm:$0xff] %vm606, %v578
    %644 = vst.msk [vmem:[%s5 + $0x128] sm:$0xff] %vm606, %v579
    %645 = vst.msk [vmem:[%s5 + $0x130] sm:$0xff] %vm606, %v580
    %646 = vst.msk [vmem:[%s5 + $0x138] sm:$0xff] %vm606, %v581
    %647 = vst.msk [vmem:[%s5 + $0x140] sm:$0xff] %vm606, %v582
    %648 = vst.msk [vmem:[%s5 + $0x148] sm:$0xff] %vm606, %v583
    %649 = vst.msk [vmem:[%s5 + $0x150] sm:$0xff] %vm606, %v584
    %650 = vst.msk [vmem:[%s5 + $0x158] sm:$0xff] %vm606, %v585
    %651 = vst.msk [vmem:[%s5 + $0x160] sm:$0xff] %vm606, %v586
    %652 = vst.msk [vmem:[%s5 + $0x168] sm:$0xff] %vm606, %v587
    %653 = vst.msk [vmem:[%s5 + $0x170] sm:$0xff] %vm606, %v588
    %654 = vst.msk [vmem:[%s5 + $0x178] sm:$0xff] %vm606, %v589
    %655 = vst.msk [vmem:[%s5 + $0x180] sm:$0xff] %vm606, %v590
    %656 = vst.msk [vmem:[%s5 + $0x188] sm:$0xff] %vm606, %v591
    %657 = vst.msk [vmem:[%s5 + $0x190] sm:$0xff] %vm606, %v592
    %658 = vst.msk [vmem:[%s5 + $0x198] sm:$0xff] %vm606, %v593
    %659 = vst.msk [vmem:[%s5 + $0x1a0] sm:$0xff] %vm606, %v594
    %660 = vst.msk [vmem:[%s5 + $0x1a8] sm:$0xff] %vm606, %v595
    %661 = vst.msk [vmem:[%s5 + $0x1b0] sm:$0xff] %vm606, %v596
    %662 = vst.msk [vmem:[%s5 + $0x1b8] sm:$0xff] %vm606, %v597
    %663 = vst.msk [vmem:[%s5 + $0x1c0] sm:$0xff] %vm606, %v598
    %664 = vst.msk [vmem:[%s5 + $0x1c8] sm:$0xff] %vm606, %v599
    %665 = vst.msk [vmem:[%s5 + $0x1d0] sm:$0xff] %vm606, %v600
    %666 = vst.msk [vmem:[%s5 + $0x1d8] sm:$0xff] %vm606, %v601
    %667 = vst.msk [vmem:[%s5 + $0x1e0] sm:$0xff] %vm606, %v602
    %668 = vst.msk [vmem:[%s5 + $0x1e8] sm:$0xff] %vm606, %v603
    %669 = vst.msk [vmem:[%s5 + $0x1f0] sm:$0xff] %vm606, %v604
    %670 = vst.msk [vmem:[%s5 + $0x1f8] sm:$0xff] %vm606, %v605
    %v671 = vlaneseq
    %v672 = vand.u32 %v671, 127
    %v673 = vadd.s32 %v672, 128
    %v674 = vadd.s32 %v672, 256
    %v675 = vadd.s32 %v672, 384
    %v676 = vlaneseq
    %v677 = vshrl.u32 %v676, 7
    %v678 = vmul.u32 %v677, 256
    %vm679 = vcmp.ge.s32.totalorder %v672, %v678
    %vm680 = vcmp.ge.s32.totalorder %v673, %v678
    %vm681 = vcmp.ge.s32.totalorder %v674, %v678
    %vm682 = vcmp.ge.s32.totalorder %v675, %v678
    %v683 = vadd.s32 %v678, 256
    %vm684 = vcmp.lt.s32.totalorder %v672, %v683
    %vm685 = vcmp.lt.s32.totalorder %v673, %v683
    %vm686 = vcmp.lt.s32.totalorder %v674, %v683
    %vm687 = vcmp.lt.s32.totalorder %v675, %v683
    %vm688 = vmand %vm679, %vm684
    %vm689 = vmand %vm680, %vm685
    %vm690 = vmand %vm681, %vm686
    %vm691 = vmand %vm682, %vm687
    %v692 = vsel %vm688, 0.00390625, 0.0
    %v693 = vsel %vm689, 0.00390625, 0.0
    %v694 = vsel %vm690, 0.00390625, 0.0
    %v695 = vsel %vm691, 0.00390625, 0.0
    %696 = vmatpush.msra.mxu0 %v557
    %697 = vmatpush.msra.mxu0 %v556
    %698 = vmatpush.msra.mxu0 %v555
    %699 = vmatpush.msra.mxu0 %v554
    %700 = vmatpush.msra.mxu0 %v553
    %701 = vmatpush.msra.mxu0 %v552
    %702 = vmatpush.msra.mxu0 %v551
    %703 = vmatpush.msra.mxu0 %v550
    %704 = vmatpush.msra.mxu0 %v549
    %705 = vmatpush.msra.mxu0 %v548
    %706 = vmatpush.msra.mxu0 %v547
    %707 = vmatpush.msra.mxu0 %v546
    %708 = vmatpush.msra.mxu0 %v545
    %709 = vmatpush.msra.mxu0 %v544
    %710 = vmatpush.msra.mxu0 %v543
    %711 = vmatpush.msra.mxu0 %v542
    %712 = vmatmul.f32.gmra.mxu0 %v692
    %v713 = vpop.f32.mrf.mxu0
    %v714 = vadd.f32 0.0, %v713
    %715 = vdwg.mxu0
    %716 = vmatpush.msra.mxu0 %v573
    %717 = vmatpush.msra.mxu0 %v572
    %718 = vmatpush.msra.mxu0 %v571
    %719 = vmatpush.msra.mxu0 %v570
    %720 = vmatpush.msra.mxu0 %v569
    %721 = vmatpush.msra.mxu0 %v568
    %722 = vmatpush.msra.mxu0 %v567
    %723 = vmatpush.msra.mxu0 %v566
    %724 = vmatpush.msra.mxu0 %v565
    %725 = vmatpush.msra.mxu0 %v564
    %726 = vmatpush.msra.mxu0 %v563
    %727 = vmatpush.msra.mxu0 %v562
    %728 = vmatpush.msra.mxu0 %v561
    %729 = vmatpush.msra.mxu0 %v560
    %730 = vmatpush.msra.mxu0 %v559
    %731 = vmatpush.msra.mxu0 %v558
    %732 = vmatmul.f32.gmra.mxu0 %v693
    %v733 = vpop.f32.mrf.mxu0
    %v734 = vadd.f32 %v714, %v733
    %735 = vdwg.mxu0
    %736 = vmatpush.msra.mxu0 %v589
    %737 = vmatpush.msra.mxu0 %v588
    %738 = vmatpush.msra.mxu0 %v587
    %739 = vmatpush.msra.mxu0 %v586
    %740 = vmatpush.msra.mxu0 %v585
    %741 = vmatpush.msra.mxu0 %v584
    %742 = vmatpush.msra.mxu0 %v583
    %743 = vmatpush.msra.mxu0 %v582
    %744 = vmatpush.msra.mxu0 %v581
    %745 = vmatpush.msra.mxu0 %v580
    %746 = vmatpush.msra.mxu0 %v579
    %747 = vmatpush.msra.mxu0 %v578
    %748 = vmatpush.msra.mxu0 %v577
    %749 = vmatpush.msra.mxu0 %v576
    %750 = vmatpush.msra.mxu0 %v575
    %751 = vmatpush.msra.mxu0 %v574
    %752 = vmatmul.f32.gmra.mxu0 %v694
    %v753 = vpop.f32.mrf.mxu0
    %v754 = vadd.f32 %v734, %v753
    %755 = vdwg.mxu0
    %756 = vmatpush.msra.mxu0 %v605
    %757 = vmatpush.msra.mxu0 %v604
    %758 = vmatpush.msra.mxu0 %v603
    %759 = vmatpush.msra.mxu0 %v602
    %760 = vmatpush.msra.mxu0 %v601
    %761 = vmatpush.msra.mxu0 %v600
    %762 = vmatpush.msra.mxu0 %v599
    %763 = vmatpush.msra.mxu0 %v598
    %764 = vmatpush.msra.mxu0 %v597
    %765 = vmatpush.msra.mxu0 %v596
    %766 = vmatpush.msra.mxu0 %v595
    %767 = vmatpush.msra.mxu0 %v594
    %768 = vmatpush.msra.mxu0 %v593
    %769 = vmatpush.msra.mxu0 %v592
    %770 = vmatpush.msra.mxu0 %v591
    %771 = vmatpush.msra.mxu0 %v590
    %772 = vmatmul.f32.gmra.mxu0 %v695
    %v773 = vpop.f32.mrf.mxu0
    %v774 = vadd.f32 %v754, %v773
    %775 = vdwg.mxu0
    %v776 = vld [vmem:[%s3] sm:$0xff]
    %v777 = vld [vmem:[%s3 + $0x8] sm:$0xff]
    %v778 = vld [vmem:[%s3 + $0x10] sm:$0xff]
    %v779 = vld [vmem:[%s3 + $0x18] sm:$0xff]
    %v780 = vld [vmem:[%s4] sm:$0x1]
    %v782 = vperm.slane %v780, 0
    %v785 = vsel %vm606, %v774, 0
    %787 = vmatpush.msra.mxu0 0.0
    %788 = vmatpush.msra.mxu0 0.0
    %789 = vmatpush.msra.mxu0 0.0
    %790 = vmatpush.msra.mxu0 0.0
    %791 = vmatpush.msra.mxu0 0.0
    %792 = vmatpush.msra.mxu0 0.0
    %793 = vmatpush.msra.mxu0 0.0
    %794 = vmatpush.msra.mxu0 0.0
    %795 = vmatpush.msra.mxu0 0.0
    %796 = vmatpush.msra.mxu0 0.0
    %797 = vmatpush.msra.mxu0 0.0
    %798 = vmatpush.msra.mxu0 0.0
    %799 = vmatpush.msra.mxu0 %v779
    %800 = vmatpush.msra.mxu0 %v778
    %801 = vmatpush.msra.mxu0 %v777
    %802 = vmatpush.msra.mxu0 %v776
    %803 = vmatmul.f32.gmra.mxu0 %v785
    %v804 = vpop.f32.mrf.mxu0
    %v805 = vadd.f32 %v782, %v804
    %806 = vdwg.mxu0
    %vm807 = vcmask 58368
    %808 = vst.msk [vmem:[#allocation2] sm:$0x3] %vm807, %v805
    // Predicated region
    $region22: #{tpu_custom_call.1} parent=1 // pred_check
      _
    $region23: #{tpu_custom_call.1} parent=1 // pred_check_branch
      %810 = sbr.rel (0) target = $region25
    $region24: #{tpu_custom_call.1} parent=1 // pred_region
      _
    $region25: #{tpu_custom_call.1} parent=1 // pred_fallthru
      _
    // Predicated region
    $region26: #{tpu_custom_call.1} parent=1 // pred_check
      _
    $region27: #{tpu_custom_call.1} parent=1 // pred_check_branch
      %812 = sbr.rel (0) target = $region29
    $region28: #{tpu_custom_call.1} parent=1 // pred_region
      %814 = vsyncadd [#allocation3], 0
      %s816 = sshll.u32 [#allocation2], 4
      %s817 = int_to_ptr.vmem [resolvable:$true] %s816
      %s818 = sshll.u32 %s6, 4
      %s819 = int_to_ptr.hbm [resolvable:$true] %s818
      %821 = dma.vmem_to_hbm [thread:$0]  %s817, 32, %s819, [#allocation3]
    $region29: #{tpu_custom_call.1} parent=1 // pred_fallthru
      _
    // Predicated region
    $region30: #{tpu_custom_call.1} parent=1 // pred_check
      _
    $region31: #{tpu_custom_call.1} parent=1 // pred_check_branch
      %823 = sbr.rel (0) target = $region33
    $region32: #{tpu_custom_call.1} parent=1 // pred_region
      _
    $region33: #{tpu_custom_call.1} parent=1 // pred_fallthru
      _
    // Predicated region
    $region34: #{tpu_custom_call.1} parent=1 // pred_check
      _
    $region35: #{tpu_custom_call.1} parent=1 // pred_check_branch
      %825 = sbr.rel (0) target = $region37
    $region36: #{tpu_custom_call.1} parent=1 // pred_region
      %827 = dma.done [#allocation3], 32
    $region37: #{tpu_custom_call.1} parent=1 // pred_fallthru
      _
    %828 = vsyncpa [#allocation3], 1

</llo_original>
